<compile_context>
chip_gen: v7x
topology: tpu7x:2x2x1
jax: 0.10.0
libtpu: 0.0.40
codegen_flags: <defaults>
</compile_context>

<pallas_src>
import numpy as np
import jax
import jax.numpy as jnp
from jax.experimental import pallas as pl
from jax.experimental.pallas import tpu as pltpu


def _round_up(x, m):
    return (x + m - 1) // m * m


def _cdiv(a, b):
    return (a + b - 1) // b


def _pick_vmem_limit():
    """~3/4 of physical VMEM (v5e/v6e: ~96 MiB, v7x: ~48 MiB); safe fallback."""
    try:
        cap = getattr(pltpu.get_tpu_info(), "vmem_capacity_bytes", None)
        if cap:
            return int(min(cap * 3 // 4, 100 * 1024 * 1024))
    except Exception:
        pass
    return 48 * 1024 * 1024


# ------------------------------------------------------------------------ kernels
def scores_kernel(hits_ref, x_ref, wt_ref, b_ref, ids_ref, attn_ref, mask_ref,
                  scores_ref, gen_ref, m_ref, l_ref):
    """Pass 1: per-V-tile gen+ptr scores, masked gen, online softmax stats."""
    i = pl.program_id(0)
    j = pl.program_id(1)
    BT = x_ref.shape[0]
    TV = wt_ref.shape[1]
    S = ids_ref.shape[1]

    # gen tile = gen_lin(x)[:, out_map] for columns [j*TV, (j+1)*TV)
    # (out_map folded into wt/b on the host; bf16 operands, f32 MXU accumulate).
    gen = jnp.dot(x_ref[...], wt_ref[...],
                  preferred_element_type=jnp.float32) + b_ref[...]

    # Masked gen output: mask streamed as int8, cast here; stored bf16.
    gen_ref[...] = (gen + (-1000000.0) * mask_ref[...].astype(jnp.float32)
                    ).astype(gen_ref.dtype)

    # out_scores tile = gen + pointer-scatter of attention mass.  The scatter loop is
    # skipped entirely on v tiles that no (remapped) ctx id lands in (hit flag in SMEM).
    scores_ref[...] = gen

    @pl.when(hits_ref[i, j] != 0)
    def _():
        ids_local = ids_ref[...] - j * TV          # [BT, S]; -1 / other-tile ids never match
        attn = attn_ref[...]                       # [BT, S] f32
        iota_v = jax.lax.broadcasted_iota(jnp.int32, (BT, TV), 1)
        acc = gen                                  # single accumulator (per perf review)
        for s in range(S):                         # S small & static -> unrolled
            acc = acc + jnp.where(iota_v == ids_local[:, s:s + 1],
                                  attn[:, s:s + 1], 0.0)
        scores_ref[...] = acc

    s_tile = scores_ref[...]

    # Online softmax statistics across the ("arbitrary") v axis; m/l live in the
    # resident [BT, 1] output blocks (same block index for every j).
    @pl.when(j == 0)
    def _():
        m_ref[...] = jnp.full_like(m_ref, -1e30)
        l_ref[...] = jnp.zeros_like(l_ref)

    m_prev = m_ref[...]
    m_new = jnp.maximum(m_prev, jnp.max(s_tile, axis=-1, keepdims=True))
    l_ref[...] = (l_ref[...] * jnp.exp(m_prev - m_new)
                  + jnp.sum(jnp.exp(s_tile - m_new), axis=-1, keepdims=True))
    m_ref[...] = m_new


def normalize_kernel(scores_ref, m_ref, l_ref, probs_ref):
    """Pass 2: probs = exp(scores - row_max) * rcp(row_sum_exp)."""
    inv = pl.reciprocal(l_ref[...], approx=True)   # EUP vrcp (free-ish slot)
    probs_ref[...] = jnp.exp(scores_ref[...] - m_ref[...]) * inv


# ------------------------------------------------------------------- one-time setup
def prepare_params(W, b, out_map, inp_to_act, tv_max=2048):
    """Hoisted host-side parameter remapping (run once, reuse across forward calls).

    tv_max: upper bound on the V-tile lane width (multiple of 128).  ~2048-4096 is a
    good default for v7x's 64 MiB VMEM; v5e/v6e (128 MiB) can use larger values.
    """
    assert tv_max % 128 == 0
    W_np = np.asarray(W)
    b_np = np.asarray(b)
    out_map_np = np.asarray(out_map)
    inp_to_act_np = np.asarray(inp_to_act)

    V_out, H = W_np.shape
    V_inp = inp_to_act_np.shape[0]

    # Lane-dense padded width and V tiling (TV multiple of 128, minimal padding).
    Vp0 = _round_up(V_out, 128)
    nv = _cdiv(Vp0, tv_max)
    TV = _round_up(_cdiv(Vp0, nv), 128)
    Vp = TV * nv

    # Fold index_select(1, out_map) into the linear parameters.
    Wt = W_np[out_map_np, :].T.astype(np.float32)        # [H, V_out]
    bm = b_np[out_map_np].astype(np.float32)             # [V_out]

    Wt_p = np.zeros((H, Vp), np.float32)
    Wt_p[:, :V_out] = Wt
    b_p = np.full((1, Vp), -1e9, np.float32)             # pad lanes -> -inf-ish bias
    b_p[0, :V_out] = bm

    # Winner table for scatter_ overwrite semantics (last source index wins per action).
    winner = {}
    for i in range(V_inp):
        winner[int(inp_to_act_np[i])] = i
    remap = np.full((V_inp,), -1, np.int32)              # non-winner sources contribute nothing
    for a, i in winner.items():
        remap[i] = a

    return dict(
        wt=jnp.asarray(Wt_p, dtype=jnp.bfloat16),        # bf16 MXU operand, half the DMA bytes
        b=jnp.asarray(b_p),                              # f32
        remap=jnp.asarray(remap),                        # [V_inp] int32
        h=H, v_out=V_out, v_pad=Vp, tv=TV,
    )


# --------------------------------------------------------------------- forward call
def sum_ptr_gen_output(x, ctx_ids, attn_scores, actionmask, params):
    """Mirrors SumPtrGenOutput.forward; returns (out_probs, None, gen_scores, attn_scores)."""
    B = x.shape[0]
    S = ctx_ids.shape[1]
    H, V_out, Vp, TV = params["h"], params["v_out"], params["v_pad"], params["tv"]
    nv = Vp // TV

    # Batch tile: multiple of 16 sublanes (bf16 packing); split into >=2 blocks when
    # B allows so both v7x TensorCores get work on the "parallel" batch axis.
    if B <= 16:
        BT = 16
    else:
        BT = min(128, _round_up(_cdiv(B, 2), 16))
    B_pad = _round_up(B, BT)
    nb = B_pad // BT

    # ctx_ids -> action ids via the winner remap table (tiny gather, outside the kernel).
    act_ids = jnp.take(params["remap"], ctx_ids.astype(jnp.int32), axis=0)

    # Pad to tile-aligned shapes (pad rows/lanes are sliced off below).
    x_p = jnp.pad(x.astype(jnp.bfloat16), ((0, B_pad - B), (0, 0)))
    ids_p = jnp.pad(act_ids, ((0, B_pad - B), (0, 0)), constant_values=-1)
    attn_p = jnp.pad(attn_scores.astype(jnp.float32), ((0, B_pad - B), (0, 0)))
    mask_p = jnp.pad(actionmask.astype(jnp.int8),
                     ((0, B_pad - B), (0, Vp - V_out)))

    # Per-(batch-tile, v-tile) scatter hit flags (scalar-prefetched into SMEM).
    tile_of_id = jnp.where(ids_p >= 0, ids_p // TV, -1).reshape(nb, BT * S)
    hits = (tile_of_id[:, :, None]
            == jnp.arange(nv, dtype=jnp.int32)[None, None, :]).any(axis=1)
    hits = hits.astype(jnp.int32)                        # [nb, nv]

    vmem_limit = _pick_vmem_limit()

    cost1 = pl.CostEstimate(
        flops=2 * B_pad * H * Vp + 10 * B_pad * Vp,
        transcendentals=2 * B_pad * Vp,
        bytes_accessed=(x_p.size * 2 + params["wt"].size * 2 + params["b"].size * 4
                        + ids_p.size * 4 + attn_p.size * 4 + mask_p.size
                        + B_pad * Vp * 4 + B_pad * Vp * 2 + 2 * B_pad * 4),
    )

    scores, gen_masked, m_row, l_row = pl.pallas_call(
        scores_kernel,
        out_shape=(jax.ShapeDtypeStruct((B_pad, Vp), jnp.float32),    # out_scores
                   jax.ShapeDtypeStruct((B_pad, Vp), jnp.bfloat16),   # gen_masked (bf16 writeback)
                   jax.ShapeDtypeStruct((B_pad, 1), jnp.float32),     # row running max
                   jax.ShapeDtypeStruct((B_pad, 1), jnp.float32)),    # row running sum-exp
        grid_spec=pltpu.PrefetchScalarGridSpec(
            num_scalar_prefetch=1,
            grid=(nb, nv),
            in_specs=[
                pl.BlockSpec((BT, H), lambda i, j, hits: (i, 0)),     # x tile (revisited over j)
                pl.BlockSpec((H, TV), lambda i, j, hits: (0, j)),     # weight tile (streamed over j)
                pl.BlockSpec((1, TV), lambda i, j, hits: (0, j)),     # bias tile
                pl.BlockSpec((BT, S), lambda i, j, hits: (i, 0)),     # remapped ctx ids
                pl.BlockSpec((BT, S), lambda i, j, hits: (i, 0)),     # attn scores
                pl.BlockSpec((BT, TV), lambda i, j, hits: (i, j)),    # action mask (int8)
            ],
            out_specs=(pl.BlockSpec((BT, TV), lambda i, j, hits: (i, j)),
                       pl.BlockSpec((BT, TV), lambda i, j, hits: (i, j)),
                       pl.BlockSpec((BT, 1), lambda i, j, hits: (i, 0)),
                       pl.BlockSpec((BT, 1), lambda i, j, hits: (i, 0)))),
        compiler_params=pltpu.CompilerParams(
            dimension_semantics=("parallel", "arbitrary"),
            vmem_limit_bytes=vmem_limit),
        cost_estimate=cost1,
    )(hits, x_p, params["wt"], params["b"], ids_p, attn_p, mask_p)

    cost2 = pl.CostEstimate(
        flops=2 * B_pad * Vp,
        transcendentals=B_pad * Vp,
        bytes_accessed=B_pad * Vp * 8 + 4 * B_pad * 4,
    )
    probs = pl.pallas_call(
        normalize_kernel,
        out_shape=jax.ShapeDtypeStruct((B_pad, Vp), jnp.float32),
        grid=(nb, nv),
        in_specs=[pl.BlockSpec((BT, TV), lambda i, j: (i, j)),
                  pl.BlockSpec((BT, 1), lambda i, j: (i, 0)),
                  pl.BlockSpec((BT, 1), lambda i, j: (i, 0))],
        out_specs=pl.BlockSpec((BT, TV), lambda i, j: (i, j)),
        compiler_params=pltpu.CompilerParams(
            dimension_semantics=("parallel", "parallel"),
            vmem_limit_bytes=vmem_limit),
        cost_estimate=cost2,
    )(scores, m_row, l_row)

    # TODO(synk): optionally emit probs in bf16 too if downstream consumers tolerate it.
    return probs[:B, :V_out], None, gen_masked[:B, :V_out], attn_scores


# ------------------------------------------------------------------------ reference
def _reference(x, ctx_ids, attn_scores, actionmask, W, b, out_map, inp_to_act):
    """Pure-numpy reference with the same (last-write-wins) scatter_ semantics."""
    x = np.asarray(x); ids = np.asarray(ctx_ids); attn = np.asarray(attn_scores)
    mask = np.asarray(actionmask).astype(np.float32)
    W = np.asarray(W); b = np.asarray(b)
    out_map = np.asarray(out_map); inp_to_act = np.asarray(inp_to_act)
    V_out = W.shape[0]; V_inp = inp_to_act.shape[0]; B = x.shape[0]

    gen = x @ W.T + b
    gen = gen[:, out_map]
    inpdist = np.zeros((B, V_inp), np.float32)
    for bi in range(B):
        for j in range(ids.shape[1]):
            inpdist[bi, ids[bi, j]] += attn[bi, j]
    ptr = np.zeros((B, V_out), np.float32)
    for i in range(V_inp):                      # later i overwrites earlier (last wins)
        ptr[:, inp_to_act[i]] = inpdist[:, i]
    out_scores = gen + ptr
    gen_masked = gen + (-1000000.0) * mask
    e = np.exp(out_scores - out_scores.max(-1, keepdims=True))
    probs = e / e.sum(-1, keepdims=True)
    return probs, gen_masked


if __name__ == "__main__":
    cases = [
        # case 0: tiny vocab, single V tile, lane padding exercised (V_OUT=100 -> Vp=128)
        dict(B=8, H=32, S=8, V_INP=32, V_OUT=100, rare=[5, 17, 99], tv_max=2048),
        # case 1: forces multi-tile V (tv_max=128 -> 3 tiles) and 2 batch blocks
        dict(B=40, H=64, S=12, V_INP=50, V_OUT=384, rare=[7, 200], tv_max=128),
    ]

    root_key = jax.random.PRNGKey(0)
    for ci, cfg in enumerate(cases):
        B, H, S = cfg["B"], cfg["H"], cfg["S"]
        V_INP, V_OUT = cfg["V_INP"], cfg["V_OUT"]

        key = jax.random.fold_in(root_key, ci)
        k_x, k_w, k_b, k_ids, k_attn, k_mask = jax.random.split(key, 6)

        x = jax.random.normal(k_x, (B, H), dtype=jnp.float32)
        W = jax.random.normal(k_w, (V_OUT, H), dtype=jnp.float32) * 0.1   # gen_lin.weight
        b = jax.random.normal(k_b, (V_OUT,), dtype=jnp.float32) * 0.1     # gen_lin.bias
        ctx_ids = jax.random.randint(k_ids, (B, S), 0, V_INP, dtype=jnp.int32)
        attn_logits = jax.random.normal(k_attn, (B, S), dtype=jnp.float32)
        attn_scores = jax.nn.softmax(attn_logits, axis=-1)
        actionmask = jax.random.bernoulli(k_mask, 0.3, (B, V_OUT))        # uint8-like

        # Deterministic synthetic vocab buffers (stand-ins for build_copy_maps / rare ids).
        out_map = np.arange(V_OUT, dtype=np.int32)
        for r in cfg["rare"]:
            out_map[r] = 1
        inp_to_act = np.zeros((V_INP,), np.int32)      # first 4 sources all -> action 0
        for i in range(4, V_INP):                      # (duplicates exercise last-write-wins)
            inp_to_act[i] = 10 + (i - 4)

        params = prepare_params(W, b, out_map, inp_to_act, tv_max=cfg["tv_max"])

        out_probs, _, gen_scores, attn_out = sum_ptr_gen_output(
            x, ctx_ids, attn_scores, actionmask, params)
        jax.block_until_ready((out_probs, gen_scores, attn_out))

        ref_probs, ref_gen = _reference(x, ctx_ids, attn_scores, actionmask,
                                        W, b, out_map, inp_to_act)

        p = np.asarray(out_probs.astype(jnp.float32))
        g = np.asarray(gen_scores.astype(jnp.float32))
        # bf16 matmul operands + bf16 gen writeback + approx reciprocal -> relaxed tolerances.
        assert np.allclose(p, ref_probs, atol=1e-2, rtol=1e-2), f"probs mismatch (case {ci})"
        assert np.allclose(g, ref_gen, atol=5e-2, rtol=1e-2), f"gen mismatch (case {ci})"
        assert np.allclose(p.sum(-1), 1.0, atol=1e-2), f"probs not normalized (case {ci})"

    print("KERNEL_OK")
</pallas_src>

<mosaic_0001>
module attributes {stable_mosaic.version = 11 : i64} {
  func.func @scores_kernel(%arg0: i32, %arg1: i32, %arg2: memref<1x1xi32, #tpu.memory_space<smem>>, %arg3: memref<16x32xbf16, #tpu.memory_space<vmem>>, %arg4: memref<32x128xbf16, #tpu.memory_space<vmem>>, %arg5: memref<1x128xf32, #tpu.memory_space<vmem>>, %arg6: memref<16x8xi32, #tpu.memory_space<vmem>>, %arg7: memref<16x8xf32, #tpu.memory_space<vmem>>, %arg8: memref<16x128xi8, #tpu.memory_space<vmem>>, %arg9: memref<16x128xf32, #tpu.memory_space<vmem>>, %arg10: memref<16x128xbf16, #tpu.memory_space<vmem>>, %arg11: memref<16x1xf32, #tpu.memory_space<vmem>>, %arg12: memref<16x1xf32, #tpu.memory_space<vmem>>) attributes {dimension_semantics = [#tpu.dimension_semantics<parallel>, #tpu.dimension_semantics<arbitrary>], iteration_bounds = array<i64: 1, 1>, scalar_prefetch = 1 : i64, scratch_operands = 0 : i64, tpu.core_type = #tpu.core_type<tc>, window_params = [{transform_indices = @transform_0, window_bounds = array<i64: 16, 32>}, {transform_indices = @transform_1, window_bounds = array<i64: 32, 128>}, {transform_indices = @transform_2, window_bounds = array<i64: 1, 128>}, {transform_indices = @transform_3, window_bounds = array<i64: 16, 8>}, {transform_indices = @transform_4, window_bounds = array<i64: 16, 8>}, {transform_indices = @transform_5, window_bounds = array<i64: 16, 128>}, {transform_indices = @transform_6, window_bounds = array<i64: 16, 128>}, {transform_indices = @transform_7, window_bounds = array<i64: 16, 128>}, {transform_indices = @transform_8, window_bounds = array<i64: 16, 1>}, {transform_indices = @transform_9, window_bounds = array<i64: 16, 1>}]} {
    %c0 = arith.constant 0 : index
    %c0_0 = arith.constant 0 : index
    %0 = vector.load %arg3[%c0, %c0_0] : memref<16x32xbf16, #tpu.memory_space<vmem>>, vector<16x32xbf16>
    %c0_1 = arith.constant 0 : index
    %c0_2 = arith.constant 0 : index
    %1 = vector.load %arg4[%c0_1, %c0_2] : memref<32x128xbf16, #tpu.memory_space<vmem>>, vector<32x128xbf16>
    %cst = arith.constant dense<0.000000e+00> : vector<16x128xf32>
    %2 = tpu.matmul %0, %1, %cst {dimension_numbers = #tpu.dot_dimension_numbers<[1], [0], [0], [1], [0, 0, 1, 1], [], []>} : vector<16x32xbf16>, vector<32x128xbf16>, vector<16x128xf32> -> vector<16x128xf32>
    %c0_3 = arith.constant 0 : index
    %c0_4 = arith.constant 0 : index
    %3 = vector.load %arg5[%c0_3, %c0_4] : memref<1x128xf32, #tpu.memory_space<vmem>>, vector<1x128xf32>
    %4 = vector.broadcast %3 : vector<1x128xf32> to vector<16x128xf32>
    %5 = arith.addf %2, %4 : vector<16x128xf32>
    %c0_5 = arith.constant 0 : index
    %c0_6 = arith.constant 0 : index
    %6 = vector.load %arg8[%c0_5, %c0_6] : memref<16x128xi8, #tpu.memory_space<vmem>>, vector<16x128xi8>
    %7 = arith.sitofp %6 : vector<16x128xi8> to vector<16x128xf32>
    %cst_7 = arith.constant -1.000000e+06 : f32
    %8 = vector.broadcast %cst_7 : f32 to vector<16x128xf32>
    %9 = arith.mulf %8, %7 : vector<16x128xf32>
    %10 = arith.addf %5, %9 : vector<16x128xf32>
    %11 = arith.truncf %10 : vector<16x128xf32> to vector<16x128xbf16>
    %c0_8 = arith.constant 0 : index
    %c0_9 = arith.constant 0 : index
    %12 = vector.load %arg10[%c0_8, %c0_9] : memref<16x128xbf16, #tpu.memory_space<vmem>>, vector<16x128xbf16>
    tpu.vector_store %arg10[%c0_8, %c0_9], %11 {strides = array<i32>} : memref<16x128xbf16, #tpu.memory_space<vmem>>, vector<16x128xbf16>,
    %c0_10 = arith.constant 0 : index
    %c0_11 = arith.constant 0 : index
    %13 = vector.load %arg9[%c0_10, %c0_11] : memref<16x128xf32, #tpu.memory_space<vmem>>, vector<16x128xf32>
    tpu.vector_store %arg9[%c0_10, %c0_11], %5 {strides = array<i32>} : memref<16x128xf32, #tpu.memory_space<vmem>>, vector<16x128xf32>,
    %14 = arith.index_cast %arg0 : i32 to index
    %15 = arith.index_cast %arg1 : i32 to index
    %16 = memref.load %arg2[%14, %15] : memref<1x1xi32, #tpu.memory_space<smem>>
    %c0_i32 = arith.constant 0 : i32
    %17 = arith.cmpi ne, %16, %c0_i32 : i32
    %18 = arith.extui %17 : i1 to i32
    %c0_i32_12 = arith.constant 0 : i32
    %19 = arith.cmpi ne, %18, %c0_i32_12 : i32
    scf.if %19 {
      %c0_27 = arith.constant 0 : index
      %c0_28 = arith.constant 0 : index
      %40 = vector.load %arg6[%c0_27, %c0_28] : memref<16x8xi32, #tpu.memory_space<vmem>>, vector<16x8xi32>
      %c128_i32 = arith.constant 128 : i32
      %41 = arith.muli %arg1, %c128_i32 : i32
      %42 = vector.broadcast %41 : i32 to vector<16x8xi32>
      %43 = arith.subi %40, %42 : vector<16x8xi32>
      %c0_29 = arith.constant 0 : index
      %c0_30 = arith.constant 0 : index
      %44 = vector.load %arg7[%c0_29, %c0_30] : memref<16x8xf32, #tpu.memory_space<vmem>>, vector<16x8xf32>
      %45 = tpu.iota {dimensions = array<i32: 1>} : vector<16x128xi32>
      %46 = vector.extract_strided_slice %43 {offsets = [0, 0], sizes = [16, 1], strides = [1, 1]} : vector<16x8xi32> to vector<16x1xi32>
      %47 = vector.broadcast %46 : vector<16x1xi32> to vector<16x128xi32>
      %48 = arith.cmpi eq, %45, %47 : vector<16x128xi32>
      %49 = vector.extract_strided_slice %44 {offsets = [0, 0], sizes = [16, 1], strides = [1, 1]} : vector<16x8xf32> to vector<16x1xf32>
      %cst_31 = arith.constant 0.000000e+00 : f32
      %50 = vector.shape_cast %49 : vector<16x1xf32> to vector<16x1xf32>
      %51 = vector.broadcast %50 : vector<16x1xf32> to vector<16x128xf32>
      %52 = vector.broadcast %cst_31 : f32 to vector<16x128xf32>
      %53 = arith.select %48, %51, %52 : vector<16x128xi1>, vector<16x128xf32>
      %54 = arith.addf %5, %53 : vector<16x128xf32>
      %55 = vector.extract_strided_slice %43 {offsets = [0, 1], sizes = [16, 1], strides = [1, 1]} : vector<16x8xi32> to vector<16x1xi32>
      %56 = vector.broadcast %55 : vector<16x1xi32> to vector<16x128xi32>
      %57 = arith.cmpi eq, %45, %56 : vector<16x128xi32>
      %58 = vector.extract_strided_slice %44 {offsets = [0, 1], sizes = [16, 1], strides = [1, 1]} : vector<16x8xf32> to vector<16x1xf32>
      %cst_32 = arith.constant 0.000000e+00 : f32
      %59 = vector.shape_cast %58 : vector<16x1xf32> to vector<16x1xf32>
      %60 = vector.broadcast %59 : vector<16x1xf32> to vector<16x128xf32>
      %61 = vector.broadcast %cst_32 : f32 to vector<16x128xf32>
      %62 = arith.select %57, %60, %61 : vector<16x128xi1>, vector<16x128xf32>
      %63 = arith.addf %54, %62 : vector<16x128xf32>
      %64 = vector.extract_strided_slice %43 {offsets = [0, 2], sizes = [16, 1], strides = [1, 1]} : vector<16x8xi32> to vector<16x1xi32>
      %65 = vector.broadcast %64 : vector<16x1xi32> to vector<16x128xi32>
      %66 = arith.cmpi eq, %45, %65 : vector<16x128xi32>
      %67 = vector.extract_strided_slice %44 {offsets = [0, 2], sizes = [16, 1], strides = [1, 1]} : vector<16x8xf32> to vector<16x1xf32>
      %cst_33 = arith.constant 0.000000e+00 : f32
      %68 = vector.shape_cast %67 : vector<16x1xf32> to vector<16x1xf32>
      %69 = vector.broadcast %68 : vector<16x1xf32> to vector<16x128xf32>
      %70 = vector.broadcast %cst_33 : f32 to vector<16x128xf32>
      %71 = arith.select %66, %69, %70 : vector<16x128xi1>, vector<16x128xf32>
      %72 = arith.addf %63, %71 : vector<16x128xf32>
      %73 = vector.extract_strided_slice %43 {offsets = [0, 3], sizes = [16, 1], strides = [1, 1]} : vector<16x8xi32> to vector<16x1xi32>
      %74 = vector.broadcast %73 : vector<16x1xi32> to vector<16x128xi32>
      %75 = arith.cmpi eq, %45, %74 : vector<16x128xi32>
      %76 = vector.extract_strided_slice %44 {offsets = [0, 3], sizes = [16, 1], strides = [1, 1]} : vector<16x8xf32> to vector<16x1xf32>
      %cst_34 = arith.constant 0.000000e+00 : f32
      %77 = vector.shape_cast %76 : vector<16x1xf32> to vector<16x1xf32>
      %78 = vector.broadcast %77 : vector<16x1xf32> to vector<16x128xf32>
      %79 = vector.broadcast %cst_34 : f32 to vector<16x128xf32>
      %80 = arith.select %75, %78, %79 : vector<16x128xi1>, vector<16x128xf32>
      %81 = arith.addf %72, %80 : vector<16x128xf32>
      %82 = vector.extract_strided_slice %43 {offsets = [0, 4], sizes = [16, 1], strides = [1, 1]} : vector<16x8xi32> to vector<16x1xi32>
      %83 = vector.broadcast %82 : vector<16x1xi32> to vector<16x128xi32>
      %84 = arith.cmpi eq, %45, %83 : vector<16x128xi32>
      %85 = vector.extract_strided_slice %44 {offsets = [0, 4], sizes = [16, 1], strides = [1, 1]} : vector<16x8xf32> to vector<16x1xf32>
      %cst_35 = arith.constant 0.000000e+00 : f32
      %86 = vector.shape_cast %85 : vector<16x1xf32> to vector<16x1xf32>
      %87 = vector.broadcast %86 : vector<16x1xf32> to vector<16x128xf32>
      %88 = vector.broadcast %cst_35 : f32 to vector<16x128xf32>
      %89 = arith.select %84, %87, %88 : vector<16x128xi1>, vector<16x128xf32>
      %90 = arith.addf %81, %89 : vector<16x128xf32>
      %91 = vector.extract_strided_slice %43 {offsets = [0, 5], sizes = [16, 1], strides = [1, 1]} : vector<16x8xi32> to vector<16x1xi32>
      %92 = vector.broadcast %91 : vector<16x1xi32> to vector<16x128xi32>
      %93 = arith.cmpi eq, %45, %92 : vector<16x128xi32>
      %94 = vector.extract_strided_slice %44 {offsets = [0, 5], sizes = [16, 1], strides = [1, 1]} : vector<16x8xf32> to vector<16x1xf32>
      %cst_36 = arith.constant 0.000000e+00 : f32
      %95 = vector.shape_cast %94 : vector<16x1xf32> to vector<16x1xf32>
      %96 = vector.broadcast %95 : vector<16x1xf32> to vector<16x128xf32>
      %97 = vector.broadcast %cst_36 : f32 to vector<16x128xf32>
      %98 = arith.select %93, %96, %97 : vector<16x128xi1>, vector<16x128xf32>
      %99 = arith.addf %90, %98 : vector<16x128xf32>
      %100 = vector.extract_strided_slice %43 {offsets = [0, 6], sizes = [16, 1], strides = [1, 1]} : vector<16x8xi32> to vector<16x1xi32>
      %101 = vector.broadcast %100 : vector<16x1xi32> to vector<16x128xi32>
      %102 = arith.cmpi eq, %45, %101 : vector<16x128xi32>
      %103 = vector.extract_strided_slice %44 {offsets = [0, 6], sizes = [16, 1], strides = [1, 1]} : vector<16x8xf32> to vector<16x1xf32>
      %cst_37 = arith.constant 0.000000e+00 : f32
      %104 = vector.shape_cast %103 : vector<16x1xf32> to vector<16x1xf32>
      %105 = vector.broadcast %104 : vector<16x1xf32> to vector<16x128xf32>
      %106 = vector.broadcast %cst_37 : f32 to vector<16x128xf32>
      %107 = arith.select %102, %105, %106 : vector<16x128xi1>, vector<16x128xf32>
      %108 = arith.addf %99, %107 : vector<16x128xf32>
      %109 = vector.extract_strided_slice %43 {offsets = [0, 7], sizes = [16, 1], strides = [1, 1]} : vector<16x8xi32> to vector<16x1xi32>
      %110 = vector.broadcast %109 : vector<16x1xi32> to vector<16x128xi32>
      %111 = arith.cmpi eq, %45, %110 : vector<16x128xi32>
      %112 = vector.extract_strided_slice %44 {offsets = [0, 7], sizes = [16, 1], strides = [1, 1]} : vector<16x8xf32> to vector<16x1xf32>
      %cst_38 = arith.constant 0.000000e+00 : f32
      %113 = vector.shape_cast %112 : vector<16x1xf32> to vector<16x1xf32>
      %114 = vector.broadcast %113 : vector<16x1xf32> to vector<16x128xf32>
      %115 = vector.broadcast %cst_38 : f32 to vector<16x128xf32>
      %116 = arith.select %111, %114, %115 : vector<16x128xi1>, vector<16x128xf32>
      %117 = arith.addf %108, %116 : vector<16x128xf32>
      %c0_39 = arith.constant 0 : index
      %c0_40 = arith.constant 0 : index
      %118 = vector.load %arg9[%c0_39, %c0_40] : memref<16x128xf32, #tpu.memory_space<vmem>>, vector<16x128xf32>
      tpu.vector_store %arg9[%c0_39, %c0_40], %117 {strides = array<i32>} : memref<16x128xf32, #tpu.memory_space<vmem>>, vector<16x128xf32>,
    } else {
    }
    %c0_13 = arith.constant 0 : index
    %c0_14 = arith.constant 0 : index
    %20 = vector.load %arg9[%c0_13, %c0_14] : memref<16x128xf32, #tpu.memory_space<vmem>>, vector<16x128xf32>
    %c0_i32_15 = arith.constant 0 : i32
    %21 = arith.cmpi eq, %arg1, %c0_i32_15 : i32
    %22 = arith.extui %21 : i1 to i32
    %c0_i32_16 = arith.constant 0 : i32
    %23 = arith.cmpi ne, %22, %c0_i32_16 : i32
    scf.if %23 {
      %cst_27 = arith.constant -1.000000e+30 : f32
      %40 = vector.broadcast %cst_27 : f32 to vector<16x1xf32>
      %c0_28 = arith.constant 0 : index
      %c0_29 = arith.constant 0 : index
      %41 = vector.load %arg11[%c0_28, %c0_29] : memref<16x1xf32, #tpu.memory_space<vmem>>, vector<16x1xf32>
      tpu.vector_store %arg11[%c0_28, %c0_29], %40 {strides = array<i32>} : memref<16x1xf32, #tpu.memory_space<vmem>>, vector<16x1xf32>,
      %cst_30 = arith.constant 0.000000e+00 : f32
      %42 = vector.broadcast %cst_30 : f32 to vector<16x1xf32>
      %c0_31 = arith.constant 0 : index
      %c0_32 = arith.constant 0 : index
      %43 = vector.load %arg12[%c0_31, %c0_32] : memref<16x1xf32, #tpu.memory_space<vmem>>, vector<16x1xf32>
      tpu.vector_store %arg12[%c0_31, %c0_32], %42 {strides = array<i32>} : memref<16x1xf32, #tpu.memory_space<vmem>>, vector<16x1xf32>,
    } else {
    }
    %c0_17 = arith.constant 0 : index
    %c0_18 = arith.constant 0 : index
    %24 = vector.load %arg11[%c0_17, %c0_18] : memref<16x1xf32, #tpu.memory_space<vmem>>, vector<16x1xf32>
    %cst_19 = arith.constant dense<0xFF800000> : vector<16xf32>
    %25 = vector.multi_reduction <maximumf>, %20, %cst_19 [1] : vector<16x128xf32> to vector<16xf32>
    %26 = vector.shape_cast %25 : vector<16xf32> to vector<16x1xf32>
    %27 = arith.maximumf %24, %26 : vector<16x1xf32>
    %c0_20 = arith.constant 0 : index
    %c0_21 = arith.constant 0 : index
    %28 = vector.load %arg12[%c0_20, %c0_21] : memref<16x1xf32, #tpu.memory_space<vmem>>, vector<16x1xf32>
    %29 = arith.subf %24, %27 : vector<16x1xf32>
    %30 = math.exp %29 : vector<16x1xf32>
    %31 = arith.mulf %28, %30 : vector<16x1xf32>
    %32 = vector.broadcast %27 : vector<16x1xf32> to vector<16x128xf32>
    %33 = arith.subf %20, %32 : vector<16x128xf32>
    %34 = math.exp %33 : vector<16x128xf32>
    %cst_22 = arith.constant dense<0.000000e+00> : vector<16xf32>
    %35 = vector.multi_reduction <add>, %34, %cst_22 [1] : vector<16x128xf32> to vector<16xf32>
    %36 = vector.shape_cast %35 : vector<16xf32> to vector<16x1xf32>
    %37 = arith.addf %31, %36 : vector<16x1xf32>
    %c0_23 = arith.constant 0 : index
    %c0_24 = arith.constant 0 : index
    %38 = vector.load %arg12[%c0_23, %c0_24] : memref<16x1xf32, #tpu.memory_space<vmem>>, vector<16x1xf32>
    tpu.vector_store %arg12[%c0_23, %c0_24], %37 {strides = array<i32>} : memref<16x1xf32, #tpu.memory_space<vmem>>, vector<16x1xf32>,
    %c0_25 = arith.constant 0 : index
    %c0_26 = arith.constant 0 : index
    %39 = vector.load %arg11[%c0_25, %c0_26] : memref<16x1xf32, #tpu.memory_space<vmem>>, vector<16x1xf32>
    tpu.vector_store %arg11[%c0_25, %c0_26], %27 {strides = array<i32>} : memref<16x1xf32, #tpu.memory_space<vmem>>, vector<16x1xf32>,
    return
  }
  func.func @transform_0(%arg0: i32, %arg1: i32, %arg2: memref<1x1xi32, #tpu.memory_space<smem>>) -> (i32, i32) {
    %c0_i32 = arith.constant 0 : i32
    %c0_i32_0 = arith.constant 0 : i32
    return %arg0, %c0_i32 : i32, i32
  }
  func.func @transform_1(%arg0: i32, %arg1: i32, %arg2: memref<1x1xi32, #tpu.memory_space<smem>>) -> (i32, i32) {
    %c0_i32 = arith.constant 0 : i32
    %c0_i32_0 = arith.constant 0 : i32
    return %c0_i32, %arg1 : i32, i32
  }
  func.func @transform_2(%arg0: i32, %arg1: i32, %arg2: memref<1x1xi32, #tpu.memory_space<smem>>) -> (i32, i32) {
    %c0_i32 = arith.constant 0 : i32
    %c0_i32_0 = arith.constant 0 : i32
    return %c0_i32, %arg1 : i32, i32
  }
  func.func @transform_3(%arg0: i32, %arg1: i32, %arg2: memref<1x1xi32, #tpu.memory_space<smem>>) -> (i32, i32) {
    %c0_i32 = arith.constant 0 : i32
    %c0_i32_0 = arith.constant 0 : i32
    return %arg0, %c0_i32 : i32, i32
  }
  func.func @transform_4(%arg0: i32, %arg1: i32, %arg2: memref<1x1xi32, #tpu.memory_space<smem>>) -> (i32, i32) {
    %c0_i32 = arith.constant 0 : i32
    %c0_i32_0 = arith.constant 0 : i32
    return %arg0, %c0_i32 : i32, i32
  }
  func.func @transform_5(%arg0: i32, %arg1: i32, %arg2: memref<1x1xi32, #tpu.memory_space<smem>>) -> (i32, i32) {
    %c0_i32 = arith.constant 0 : i32
    return %arg0, %arg1 : i32, i32
  }
  func.func @transform_6(%arg0: i32, %arg1: i32, %arg2: memref<1x1xi32, #tpu.memory_space<smem>>) -> (i32, i32) {
    %c0_i32 = arith.constant 0 : i32
    return %arg0, %arg1 : i32, i32
  }
  func.func @transform_7(%arg0: i32, %arg1: i32, %arg2: memref<1x1xi32, #tpu.memory_space<smem>>) -> (i32, i32) {
    %c0_i32 = arith.constant 0 : i32
    return %arg0, %arg1 : i32, i32
  }
  func.func @transform_8(%arg0: i32, %arg1: i32, %arg2: memref<1x1xi32, #tpu.memory_space<smem>>) -> (i32, i32) {
    %c0_i32 = arith.constant 0 : i32
    %c0_i32_0 = arith.constant 0 : i32
    return %arg0, %c0_i32 : i32, i32
  }
  func.func @transform_9(%arg0: i32, %arg1: i32, %arg2: memref<1x1xi32, #tpu.memory_space<smem>>) -> (i32, i32) {
    %c0_i32 = arith.constant 0 : i32
    %c0_i32_0 = arith.constant 0 : i32
    return %arg0, %c0_i32 : i32, i32
  }
}

</mosaic_0001>

<llo_original>
// kernel: tpu_custom_call.1
$region0: #{tpu_custom_call.1}
  #allocation0 [shape = 'u32[]', space=smem, size = 0x4, offset = 0x4, fixed_abs, tag = 'smem constant byte address 0x4 - core index']
  #allocation1 [shape = 'u32[144,128]{1,0:T(1,128)}', space=vmem, size = 0x12000, scoped, tag = 'internal scratch']
  #allocation2 [shape = 's32[1]{0}', space=sflag, size = 0x4, scoped, tag = 'scoped memory for tpu_custom_call.1']
  #allocation3 [shape = 's32[1,1]{1,0:T(1,128)S(6)}', space=smem, size = 0x200, scoped, tag = 'prefetched SMEM operand 0']
  %s0 = inlined_call_operand.<no memory space> [shape: s32[1,1], index: 0, kind: input, shape index: {}]
  %s1 = inlined_call_operand.vmem [shape: bf16[16,32], index: 1, kind: input, shape index: {}]
  %s2 = inlined_call_operand.vmem [shape: bf16[32,128], index: 2, kind: input, shape index: {}]
  %s3 = inlined_call_operand.vmem [shape: f32[1,128], index: 3, kind: input, shape index: {}]
  %s4 = inlined_call_operand.vmem [shape: s32[16,8], index: 4, kind: input, shape index: {}]
  %s5 = inlined_call_operand.vmem [shape: f32[16,8], index: 5, kind: input, shape index: {}]
  %s6 = inlined_call_operand.vmem [shape: s8[16,128], index: 6, kind: input, shape index: {}]
  %s7 = inlined_call_operand.hbm [shape: f32[16,128], index: 7, kind: output, shape index: {0}]
  %s8 = inlined_call_operand.hbm [shape: bf16[16,128], index: 8, kind: output, shape index: {1}]
  %s9 = inlined_call_operand.vmem [shape: f32[16,1], index: 9, kind: output, shape index: {2}]
  %s10 = inlined_call_operand.vmem [shape: f32[16,1], index: 10, kind: output, shape index: {3}]
  %11 = xla_tuple %s7, %s8, %s9, %s10
  %s12 = sld [smem:[#allocation0]]
  $region66: #{tpu_custom_call.1} parent=0
    _
  %s14 = ssub.s32 1, %s12
  %s15 = scalar_select 0, %s14, %s12
  %16 = sst [smem:[#allocation3]] %s0
  $region1: #{tpu_custom_call.1} parent=0
    #allocation4 [shape = 'u8[8192]{0}', space=vmem, size = 0x2000, scoped, tag = 'output window, operand 0, single buffered']
    #allocation5 [shape = 's32[1]{0}', space=sflag, size = 0x4, scoped, tag = 'scoped memory for tpu_custom_call.1']
    #allocation6 [shape = 'u8[4096]{0}', space=vmem, size = 0x1000, scoped, tag = 'output window, operand 1, single buffered']
    #allocation7 [shape = 's32[1]{0}', space=sflag, size = 0x4, scoped, tag = 'scoped memory for tpu_custom_call.1']
    %17 = vsyncpa [#allocation5], 0
    %18 = vsyncpa [#allocation7], 0
    // Predicated region
    $region2: #{tpu_custom_call.1} parent=1 // pred_check
      _
    $region3: #{tpu_custom_call.1} parent=1 // pred_check_branch
      %20 = sbr.rel (0) target = $region5
    $region4: #{tpu_custom_call.1} parent=1 // pred_region
      _
    $region5: #{tpu_custom_call.1} parent=1 // pred_fallthru
      _
    // Predicated region
    $region6: #{tpu_custom_call.1} parent=1 // pred_check
      _
    $region7: #{tpu_custom_call.1} parent=1 // pred_check_branch
      %22 = sbr.rel (0) target = $region9
    $region8: #{tpu_custom_call.1} parent=1 // pred_region
      _
    $region9: #{tpu_custom_call.1} parent=1 // pred_fallthru
      _
    // Predicated region
    $region10: #{tpu_custom_call.1} parent=1 // pred_check
      _
    $region11: #{tpu_custom_call.1} parent=1 // pred_check_branch
      %24 = sbr.rel (0) target = $region13
    $region12: #{tpu_custom_call.1} parent=1 // pred_region
      _
    $region13: #{tpu_custom_call.1} parent=1 // pred_fallthru
      _
    // Predicated region
    $region14: #{tpu_custom_call.1} parent=1 // pred_check
      _
    $region15: #{tpu_custom_call.1} parent=1 // pred_check_branch
      %26 = sbr.rel (0) target = $region17
    $region16: #{tpu_custom_call.1} parent=1 // pred_region
      _
    $region17: #{tpu_custom_call.1} parent=1 // pred_fallthru
      _
    // Predicated region
    $region18: #{tpu_custom_call.1} parent=1 // pred_check
      _
    $region19: #{tpu_custom_call.1} parent=1 // pred_check_branch
      %28 = sbr.rel (0) target = $region21
    $region20: #{tpu_custom_call.1} parent=1 // pred_region
      _
    $region21: #{tpu_custom_call.1} parent=1 // pred_fallthru
      _
    // Predicated region
    $region22: #{tpu_custom_call.1} parent=1 // pred_check
      _
    $region23: #{tpu_custom_call.1} parent=1 // pred_check_branch
      %30 = sbr.rel (0) target = $region25
    $region24: #{tpu_custom_call.1} parent=1 // pred_region
      _
    $region25: #{tpu_custom_call.1} parent=1 // pred_fallthru
      _
    %v32 = vld [vmem:[%s1] sm:$0xf]
    %v33 = vld [vmem:[%s1 + $0x4] sm:$0xf]
    %v34 = vld [vmem:[%s2] sm:$0xf]
    %v35 = vld [vmem:[%s2 + $0x4] sm:$0xf]
    %v36 = vld [vmem:[%s2 + $0x8] sm:$0xf]
    %v37 = vld [vmem:[%s2 + $0xc] sm:$0xf]
    %v38 = vld [vmem:[%s3] sm:$0x1]
    %v40 = vlaneseq
    %v41 = vshrl.u32 %v40, 7
    %v42 = vsub.s32 0, %v41
    %v43 = vrot.slane %v38, %v42
    %v47 = vunpack.c.l.b16 %v32
    %v48 = vunpack.c.l.b16 %v33
    %v49 = vpack.c.b16 %v48, %v47
    %v54 = vunpack.c.l.b16 %v34
    %v55 = vunpack.c.l.b16 %v35
    %v56 = vunpack.c.l.b16 %v36
    %v57 = vunpack.c.l.b16 %v37
    %v58 = vpack.c.b16 %v55, %v54
    %v59 = vpack.c.b16 %v57, %v56
    %vm62 = vcmask 261120
    %v64 = vsel %vm62, %v49, 0
    %66 = vmatprep.subr.bf16.mxu0 0
    %67 = vmatpush1.bf16.msra.mxu0 %v58
    %68 = vmatprep.subr.bf16.mxu0 0
    %69 = vmatpush1.bf16.msra.mxu0 %v59
    %70 = vmatprep.subr.bf16.mxu0 0
    %71 = vmatpush1.bf16.msra.mxu0 0
    %72 = vmatprep.subr.bf16.mxu0 0
    %73 = vmatpush1.bf16.msra.mxu0 0
    %74 = vmatprep.subr.bf16.mxu0 0
    %75 = vmatpush1.bf16.msra.mxu0 0
    %76 = vmatprep.subr.bf16.mxu0 0
    %77 = vmatpush1.bf16.msra.mxu0 0
    %78 = vmatprep.subr.bf16.mxu0 0
    %79 = vmatpush1.bf16.msra.mxu0 0
    %80 = vmatprep.subr.bf16.mxu0 0
    %81 = vmatpush1.bf16.msra.mxu0 0
    %82 = vmatprep.subr.bf16.mxu0 0
    %83 = vmatpush1.bf16.msra.mxu0 0
    %84 = vmatprep.subr.bf16.mxu0 0
    %85 = vmatpush1.bf16.msra.mxu0 0
    %86 = vmatprep.subr.bf16.mxu0 0
    %87 = vmatpush1.bf16.msra.mxu0 0
    %88 = vmatprep.subr.bf16.mxu0 0
    %89 = vmatpush1.bf16.msra.mxu0 0
    %90 = vmatprep.subr.bf16.mxu0 0
    %91 = vmatpush1.bf16.msra.mxu0 0
    %92 = vmatprep.subr.bf16.mxu0 0
    %93 = vmatpush1.bf16.msra.mxu0 0
    %94 = vmatprep.subr.bf16.mxu0 0
    %95 = vmatpush1.bf16.msra.mxu0 0
    %96 = vmatprep.subr.bf16.mxu0 0
    %97 = vmatpush1.bf16.msra.mxu0 0
    %98 = vmatprep.mubr.bf16.mxu0 0
    %99 = vmatmul.mubr.bf16.gmra.mrb[0].mxu0 %v64
    %v100 = vpop.f32.mrb[0].mxu0
    %v101 = vadd.f32 %v43, %v100
    %v102 = vpop.f32.mrb[0].mxu0
    %v103 = vpop.f32.mrb[0].mxu0
    %v104 = vadd.f32 %v43, %v103
    %v105 = vpop.f32.mrb[0].mxu0
    %106 = vdwg.mxu0
    %v107 = vld [vmem:[%s6] sm:$0x3]
    %v108 = vld [vmem:[%s6 + $0x2] sm:$0x3]
    %v109 = vunpack.c.0.s8 %v107
    %v110 = vunpack.c.0.s8 %v108
    %v111 = vcvt.s32.f32 %v109
    %v112 = vcvt.s32.f32 %v110
    %v113 = vmul.f32 %v111, -1000000.0
    %v114 = vmul.f32 %v112, -1000000.0
    %v115 = vadd.f32 %v101, %v113
    %v116 = vadd.f32 %v104, %v114
    %v117 = vpack.c.bf16 %v116, %v115
    %v119 = vunpack.c.l.b16 %v117
    %v120 = vunpack.c.h.b16 %v117
    %v121 = vpack.c.b16 %v119, %v119
    %v122 = vpack.c.b16 %v120, %v120
    %125 = vst [vmem:[#allocation6] sm:$0xf] %v121
    %126 = vst [vmem:[#allocation6 + $0x4] sm:$0xf] %v122
    %127 = vst [vmem:[#allocation4] sm:$0xff] %v101
    %128 = vst [vmem:[#allocation4 + $0x8] sm:$0xff] %v104
    %s129 = sadd.s32 0, 0
    %s130 = smul.u32 %s129, 128
    %s131 = sadd.s32 %s130, 0
    %s132 = sld [smem:[#allocation3 + %s131]]
    %p133 = scmp.ne.s32.totalorder %s132, 0
    // Predicated region
    $region26: #{tpu_custom_call.1} parent=1 // pred_check
      %p134 = pneg %p133
    $region27: #{tpu_custom_call.1} parent=1 // pred_check_branch
      %136 = sbr.rel (%p134) target = $region29
    $region28: #{tpu_custom_call.1} parent=1 // pred_region
      %v137 = vld [vmem:[%s4] sm:$0xff]
      %v138 = vld [vmem:[%s4 + $0x8] sm:$0xff]
      %s139 = smul.u32 0, 128
      %v140 = vstv %s139
      %v141 = vsub.s32 %v137, %v140
      %v142 = vsub.s32 %v138, %v140
      %v143 = vld [vmem:[%s5] sm:$0xff]
      %v144 = vld [vmem:[%s5 + $0x8] sm:$0xff]
      %v145 = vlaneseq
      %v146 = vand.u32 %v145, 127
      %147 = vset.pattern.permute.xlu0 0
      %148 = vperm.xlu0 %147, %v141
      %v149 = vpop.permute.xlu0 %148
      %150 = vset.pattern.permute.xlu0 0
      %151 = vperm.xlu0 %150, %v142
      %v152 = vpop.permute.xlu0 %151
      %vm153 = vcmp.eq.s32.totalorder %v146, %v149
      %vm154 = vcmp.eq.s32.totalorder %v146, %v152
      %156 = vset.pattern.permute.xlu0 0
      %157 = vperm.xlu0 %156, %v143
      %v158 = vpop.permute.xlu0 %157
      %161 = vset.pattern.permute.xlu0 0
      %162 = vperm.xlu0 %161, %v144
      %v163 = vpop.permute.xlu0 %162
      %v165 = vsel %vm153, %v158, 0.0
      %v166 = vsel %vm154, %v163, 0.0
      %v167 = vadd.f32 %v101, %v165
      %v168 = vadd.f32 %v104, %v166
      %169 = vset.pattern.permute.xlu0 1
      %170 = vperm.xlu0 %169, %v141
      %v171 = vpop.permute.xlu0 %170
      %172 = vset.pattern.permute.xlu0 1
      %173 = vperm.xlu0 %172, %v142
      %v174 = vpop.permute.xlu0 %173
      %vm175 = vcmp.eq.s32.totalorder %v146, %v171
      %vm176 = vcmp.eq.s32.totalorder %v146, %v174
      %177 = vset.pattern.permute.xlu0 1
      %178 = vperm.xlu0 %177, %v143
      %v179 = vpop.permute.xlu0 %178
      %181 = vset.pattern.permute.xlu0 1
      %182 = vperm.xlu0 %181, %v144
      %v183 = vpop.permute.xlu0 %182
      %v185 = vsel %vm175, %v179, 0.0
      %v186 = vsel %vm176, %v183, 0.0
      %v187 = vadd.f32 %v167, %v185
      %v188 = vadd.f32 %v168, %v186
      %189 = vset.pattern.permute.xlu0 2
      %190 = vperm.xlu0 %189, %v141
      %v191 = vpop.permute.xlu0 %190
      %192 = vset.pattern.permute.xlu0 2
      %193 = vperm.xlu0 %192, %v142
      %v194 = vpop.permute.xlu0 %193
      %vm195 = vcmp.eq.s32.totalorder %v146, %v191
      %vm196 = vcmp.eq.s32.totalorder %v146, %v194
      %197 = vset.pattern.permute.xlu0 2
      %198 = vperm.xlu0 %197, %v143
      %v199 = vpop.permute.xlu0 %198
      %201 = vset.pattern.permute.xlu0 2
      %202 = vperm.xlu0 %201, %v144
      %v203 = vpop.permute.xlu0 %202
      %v205 = vsel %vm195, %v199, 0.0
      %v206 = vsel %vm196, %v203, 0.0
      %v207 = vadd.f32 %v187, %v205
      %v208 = vadd.f32 %v188, %v206
      %209 = vset.pattern.permute.xlu0 3
      %210 = vperm.xlu0 %209, %v141
      %v211 = vpop.permute.xlu0 %210
      %212 = vset.pattern.permute.xlu0 3
      %213 = vperm.xlu0 %212, %v142
      %v214 = vpop.permute.xlu0 %213
      %vm215 = vcmp.eq.s32.totalorder %v146, %v211
      %vm216 = vcmp.eq.s32.totalorder %v146, %v214
      %217 = vset.pattern.permute.xlu0 3
      %218 = vperm.xlu0 %217, %v143
      %v219 = vpop.permute.xlu0 %218
      %221 = vset.pattern.permute.xlu0 3
      %222 = vperm.xlu0 %221, %v144
      %v223 = vpop.permute.xlu0 %222
      %v225 = vsel %vm215, %v219, 0.0
      %v226 = vsel %vm216, %v223, 0.0
      %v227 = vadd.f32 %v207, %v225
      %v228 = vadd.f32 %v208, %v226
      %229 = vset.pattern.permute.xlu0 4
      %230 = vperm.xlu0 %229, %v141
      %v231 = vpop.permute.xlu0 %230
      %232 = vset.pattern.permute.xlu0 4
      %233 = vperm.xlu0 %232, %v142
      %v234 = vpop.permute.xlu0 %233
      %vm235 = vcmp.eq.s32.totalorder %v146, %v231
      %vm236 = vcmp.eq.s32.totalorder %v146, %v234
      %237 = vset.pattern.permute.xlu0 4
      %238 = vperm.xlu0 %237, %v143
      %v239 = vpop.permute.xlu0 %238
      %241 = vset.pattern.permute.xlu0 4
      %242 = vperm.xlu0 %241, %v144
      %v243 = vpop.permute.xlu0 %242
      %v245 = vsel %vm235, %v239, 0.0
      %v246 = vsel %vm236, %v243, 0.0
      %v247 = vadd.f32 %v227, %v245
      %v248 = vadd.f32 %v228, %v246
      %249 = vset.pattern.permute.xlu0 5
      %250 = vperm.xlu0 %249, %v141
      %v251 = vpop.permute.xlu0 %250
      %252 = vset.pattern.permute.xlu0 5
      %253 = vperm.xlu0 %252, %v142
      %v254 = vpop.permute.xlu0 %253
      %vm255 = vcmp.eq.s32.totalorder %v146, %v251
      %vm256 = vcmp.eq.s32.totalorder %v146, %v254
      %257 = vset.pattern.permute.xlu0 5
      %258 = vperm.xlu0 %257, %v143
      %v259 = vpop.permute.xlu0 %258
      %261 = vset.pattern.permute.xlu0 5
      %262 = vperm.xlu0 %261, %v144
      %v263 = vpop.permute.xlu0 %262
      %v265 = vsel %vm255, %v259, 0.0
      %v266 = vsel %vm256, %v263, 0.0
      %v267 = vadd.f32 %v247, %v265
      %v268 = vadd.f32 %v248, %v266
      %269 = vset.pattern.permute.xlu0 6
      %270 = vperm.xlu0 %269, %v141
      %v271 = vpop.permute.xlu0 %270
      %272 = vset.pattern.permute.xlu0 6
      %273 = vperm.xlu0 %272, %v142
      %v274 = vpop.permute.xlu0 %273
      %vm275 = vcmp.eq.s32.totalorder %v146, %v271
      %vm276 = vcmp.eq.s32.totalorder %v146, %v274
      %277 = vset.pattern.permute.xlu0 6
      %278 = vperm.xlu0 %277, %v143
      %v279 = vpop.permute.xlu0 %278
      %281 = vset.pattern.permute.xlu0 6
      %282 = vperm.xlu0 %281, %v144
      %v283 = vpop.permute.xlu0 %282
      %v285 = vsel %vm275, %v279, 0.0
      %v286 = vsel %vm276, %v283, 0.0
      %v287 = vadd.f32 %v267, %v285
      %v288 = vadd.f32 %v268, %v286
      %289 = vset.pattern.permute.xlu0 7
      %290 = vperm.xlu0 %289, %v141
      %v291 = vpop.permute.xlu0 %290
      %292 = vset.pattern.permute.xlu0 7
      %293 = vperm.xlu0 %292, %v142
      %v294 = vpop.permute.xlu0 %293
      %vm295 = vcmp.eq.s32.totalorder %v146, %v291
      %vm296 = vcmp.eq.s32.totalorder %v146, %v294
      %297 = vset.pattern.permute.xlu0 7
      %298 = vperm.xlu0 %297, %v143
      %v299 = vpop.permute.xlu0 %298
      %301 = vset.pattern.permute.xlu0 7
      %302 = vperm.xlu0 %301, %v144
      %v303 = vpop.permute.xlu0 %302
      %v305 = vsel %vm295, %v299, 0.0
      %v306 = vsel %vm296, %v303, 0.0
      %v307 = vadd.f32 %v287, %v305
      %v308 = vadd.f32 %v288, %v306
      %309 = vst [vmem:[#allocation4] sm:$0xff] %v307
      %310 = vst [vmem:[#allocation4 + $0x8] sm:$0xff] %v308
    $region29: #{tpu_custom_call.1} parent=1 // pred_fallthru
      _
    %v311 = vld [vmem:[#allocation4] sm:$0xff]
    %v312 = vld [vmem:[#allocation4 + $0x8] sm:$0xff]
    %p313 = scmp.eq.s32.totalorder 0, 0
    // Predicated region
    $region30: #{tpu_custom_call.1} parent=1 // pred_check
      %p314 = pneg %p313
    $region31: #{tpu_custom_call.1} parent=1 // pred_check_branch
      %316 = sbr.rel (%p314) target = $region33
    $region32: #{tpu_custom_call.1} parent=1 // pred_region
      %vm317 = vcmask 7168
      %318 = vst.msk [vmem:[%s9] sm:$0xff] %vm317, -1e+30
      %319 = vst.msk [vmem:[%s9 + $0x8] sm:$0xff] %vm317, -1e+30
      %320 = vst.msk [vmem:[%s10] sm:$0xff] %vm317, 0.0
      %321 = vst.msk [vmem:[%s10 + $0x8] sm:$0xff] %vm317, 0.0
    $region33: #{tpu_custom_call.1} parent=1 // pred_fallthru
      _
    %v322 = vld [vmem:[%s9] sm:$0xff]
    %v323 = vld [vmem:[%s9 + $0x8] sm:$0xff]
    %324 = vmax.xlane.f32.xlu0 %v311
    %v325 = vpop.xlane.xlu0 %324
    %326 = vmax.xlane.f32.xlu0 %v312
    %v327 = vpop.xlane.xlu0 %326
    %v328 = vmax.f32 %v322, %v325
    %v329 = vmax.f32 %v323, %v327
    %v330 = vld [vmem:[%s10] sm:$0xff]
    %v331 = vld [vmem:[%s10 + $0x8] sm:$0xff]
    %v332 = vsub.f32 %v322, %v328
    %v333 = vsub.f32 %v323, %v329
    %v334 = vmul.f32 %v332, 1.442695
    %v335 = vpow.pop %v334
    %v336 = vmul.f32 %v333, 1.442695
    %v337 = vpow.pop %v336
    %v338 = vmul.f32 %v330, %v335
    %v339 = vmul.f32 %v331, %v337
    %341 = vset.pattern.permute.xlu0 0
    %342 = vperm.xlu0 %341, %v328
    %v343 = vpop.permute.xlu0 %342
    %346 = vset.pattern.permute.xlu0 0
    %347 = vperm.xlu0 %346, %v329
    %v348 = vpop.permute.xlu0 %347
    %v350 = vsub.f32 %v311, %v343
    %v351 = vsub.f32 %v312, %v348
    %v352 = vmul.f32 %v350, 1.442695
    %v353 = vpow.pop %v352
    %v354 = vmul.f32 %v351, 1.442695
    %v355 = vpow.pop %v354
    %356 = vadd.xlane.f32.xlu0 %v353
    %v357 = vpop.xlane.xlu0 %356
    %358 = vadd.xlane.f32.xlu0 %v355
    %v359 = vpop.xlane.xlu0 %358
    %v360 = vadd.f32 %v338, %v357
    %v361 = vadd.f32 %v339, %v359
    %vm362 = vcmask 7168
    %363 = vst.msk [vmem:[%s10] sm:$0xff] %vm362, %v360
    %364 = vst.msk [vmem:[%s10 + $0x8] sm:$0xff] %vm362, %v361
    %365 = vst.msk [vmem:[%s9] sm:$0xff] %vm362, %v328
    %366 = vst.msk [vmem:[%s9 + $0x8] sm:$0xff] %vm362, %v329
    // Predicated region
    $region34: #{tpu_custom_call.1} parent=1 // pred_check
      _
    $region35: #{tpu_custom_call.1} parent=1 // pred_check_branch
      %368 = sbr.rel (0) target = $region37
    $region36: #{tpu_custom_call.1} parent=1 // pred_region
      %s370 = ssub.s32 256, 256
      %371 = vsyncadd [#allocation5], %s370
      %s372 = sshll.u32 [#allocation4], 4
      %s373 = int_to_ptr.vmem [resolvable:$true] %s372
      %378 = dma.vmem_to_hbm [thread:$0]  %s373, 256, %s7, [#allocation5], 128, 128, 8
    $region37: #{tpu_custom_call.1} parent=1 // pred_fallthru
      _
    // Predicated region
    $region38: #{tpu_custom_call.1} parent=1 // pred_check
      _
    $region39: #{tpu_custom_call.1} parent=1 // pred_check_branch
      %380 = sbr.rel (0) target = $region41
    $region40: #{tpu_custom_call.1} parent=1 // pred_region
      %s382 = ssub.s32 128, 128
      %383 = vsyncadd [#allocation7], %s382
      %s384 = sshll.u32 [#allocation6], 4
      %s385 = int_to_ptr.vmem [resolvable:$true] %s384
      %390 = dma.vmem_to_hbm [thread:$0]  %s385, 128, %s8, [#allocation7], 64, 64, 4
    $region41: #{tpu_custom_call.1} parent=1 // pred_fallthru
      _
    // Predicated region
    $region42: #{tpu_custom_call.1} parent=1 // pred_check
      _
    $region43: #{tpu_custom_call.1} parent=1 // pred_check_branch
      %392 = sbr.rel (0) target = $region45
    $region44: #{tpu_custom_call.1} parent=1 // pred_region
      _
    $region45: #{tpu_custom_call.1} parent=1 // pred_fallthru
      _
    // Predicated region
    $region46: #{tpu_custom_call.1} parent=1 // pred_check
      _
    $region47: #{tpu_custom_call.1} parent=1 // pred_check_branch
      %394 = sbr.rel (0) target = $region49
    $region48: #{tpu_custom_call.1} parent=1 // pred_region
      _
    $region49: #{tpu_custom_call.1} parent=1 // pred_fallthru
      _
    // Predicated region
    $region50: #{tpu_custom_call.1} parent=1 // pred_check
      _
    $region51: #{tpu_custom_call.1} parent=1 // pred_check_branch
      %396 = sbr.rel (0) target = $region53
    $region52: #{tpu_custom_call.1} parent=1 // pred_region
      %397 = dma.done [#allocation5], 256
    $region53: #{tpu_custom_call.1} parent=1 // pred_fallthru
      _
    // Predicated region
    $region54: #{tpu_custom_call.1} parent=1 // pred_check
      _
    $region55: #{tpu_custom_call.1} parent=1 // pred_check_branch
      %399 = sbr.rel (0) target = $region57
    $region56: #{tpu_custom_call.1} parent=1 // pred_region
      %400 = dma.done [#allocation7], 128
    $region57: #{tpu_custom_call.1} parent=1 // pred_fallthru
      _
    // Predicated region
    $region58: #{tpu_custom_call.1} parent=1 // pred_check
      _
    $region59: #{tpu_custom_call.1} parent=1 // pred_check_branch
      %402 = sbr.rel (0) target = $region61
    $region60: #{tpu_custom_call.1} parent=1 // pred_region
      _
    $region61: #{tpu_custom_call.1} parent=1 // pred_fallthru
      _
    // Predicated region
    $region62: #{tpu_custom_call.1} parent=1 // pred_check
      _
    $region63: #{tpu_custom_call.1} parent=1 // pred_check_branch
      %404 = sbr.rel (0) target = $region65
    $region64: #{tpu_custom_call.1} parent=1 // pred_region
      _
    $region65: #{tpu_custom_call.1} parent=1 // pred_fallthru
      _
    %405 = vsyncpa [#allocation5], 1
    %406 = vsyncpa [#allocation7], 1

</llo_original>
